<compile_context>
chip_gen: v7x
topology: tpu7x:2x2x1
jax: 0.10.0
libtpu: 0.0.40
codegen_flags: <defaults>
</compile_context>

<pallas_src>
import functools

import jax
import jax.numpy as jnp
from jax.experimental import pallas as pl
from jax.experimental.pallas import tpu as pltpu


def _concave_taylor_kernel(logits_ref, target_ref, out_ref, acc_ref, *,
                           alpha, scale, gamma, n_total, tile_n):
    i = pl.program_id(0)

    @pl.when(i == 0)
    def _init():
        acc_ref[0] = jnp.float32(0.0)

    x = logits_ref[...].astype(jnp.float32)            # (TN, C)
    t = target_ref[...]                                 # (TN, 1) int32

    # numerically-stable log-sum-exp along the class (lane) axis
    m = jnp.max(x, axis=-1, keepdims=True)                                   # (TN, 1)
    lse = m + jnp.log(jnp.sum(jnp.exp(x - m), axis=-1, keepdims=True))       # (TN, 1)

    # gather the target-class logit via a compare+select (no dynamic gather on TPU)
    col = jax.lax.broadcasted_iota(jnp.int32, x.shape, 1)                    # (TN, C)
    x_t = jnp.sum(jnp.where(col == t, x, 0.0), axis=-1, keepdims=True)       # (TN, 1)

    ce = lse - x_t                                       # per-sample CE, (TN, 1)
    p = jnp.exp(-ce)

    # Taylor recurrence with explicit multiplies (no jnp.power)
    loss = alpha * ce
    p_pow = p
    for k in range(gamma):
        loss = alpha * loss - (1.0 - alpha) * p_pow
        if k + 1 < gamma:
            p_pow = p_pow * p

    # mask rows of a ragged last tile (padded rows contribute 0 to the sum;
    # a select also discards any NaN/inf arising from padded garbage logits)
    row = jax.lax.broadcasted_iota(jnp.int32, loss.shape, 0) + i * tile_n
    loss = jnp.where(row < n_total, loss, 0.0)

    acc_ref[0] += jnp.sum(loss)

    @pl.when(i == pl.num_programs(0) - 1)
    def _finalize():
        out_ref[0, 0] = acc_ref[0] * jnp.float32(scale)   # scale = beta / N


def concave_taylor_loss(logits, targets, *, alpha=1.0, beta=1.0, gamma=2,
                        tile_n=None):
    """logits: (N, C) float (f32 or bf16), targets: (N,) int class indices.

    Returns scalar float32 = beta * mean(concave-Taylor per-sample loss).
    """
    n, c = logits.shape
    targets_2d = targets.astype(jnp.int32).reshape(n, 1)
    itemsize = jnp.dtype(logits.dtype).itemsize

    if tile_n is None:
        # Size the tile off the f32 compute footprint (~2 MiB): already at
        # the HBM-BW knee for this elementwise/reduce workload, and leaves
        # plenty of VMEM headroom for the double-buffered input tile plus
        # elementwise temporaries under every generation's scoped limit.
        target_bytes = 2 << 20
        tile_n = max(1, target_bytes // (c * 4))
    tile_n = min(int(tile_n), n)
    if tile_n < n:
        tile_n = max(8, (tile_n // 8) * 8)   # sublane-aligned tiles
    else:
        tile_n = n                           # full-extent block is always legal

    grid = (pl.cdiv(n, tile_n),)

    kernel = functools.partial(
        _concave_taylor_kernel,
        alpha=float(alpha),
        scale=float(beta) / float(n),
        gamma=int(gamma),
        n_total=int(n),
        tile_n=int(tile_n),
    )

    cost = pl.CostEstimate(
        flops=8 * n * c,                     # max/sub/sum/compare/select/FMA chain
        transcendentals=n * (c + 2),         # exp over logits + log + exp(-ce)
        bytes_accessed=n * c * itemsize + n * 4 + 4,
    )

    out = pl.pallas_call(
        kernel,
        out_shape=jax.ShapeDtypeStruct((1, 1), jnp.float32),
        grid=grid,
        in_specs=[
            pl.BlockSpec((tile_n, c), lambda i: (i, 0)),   # logits row-tile
            pl.BlockSpec((tile_n, 1), lambda i: (i, 0)),   # targets row-tile
        ],
        out_specs=pl.BlockSpec(memory_space=pltpu.SMEM),   # scalar result
        scratch_shapes=[pltpu.SMEM((1,), jnp.float32)],    # running sum
        compiler_params=pltpu.CompilerParams(
            dimension_semantics=("arbitrary",),            # serial accumulation axis
            vmem_limit_bytes=32 << 20,
        ),
        cost_estimate=cost,
    )(logits, targets_2d)
    return out[0, 0]


def _reference(logits, targets, alpha=1.0, beta=1.0, gamma=2):
    logp = jax.nn.log_softmax(logits.astype(jnp.float32), axis=-1)
    ce = -jnp.take_along_axis(logp, targets[:, None].astype(jnp.int32), axis=-1)[:, 0]
    p = jnp.exp(-ce)
    loss = alpha * ce
    for n in range(gamma):
        loss = alpha * loss - (1.0 - alpha) * (p ** (n + 1))
    return beta * loss.mean()


if __name__ == "__main__":
    key = jax.random.PRNGKey(0)
    k1, k2, k3, k4, k5, k6 = jax.random.split(key, 6)

    # Test 1: small, single tile, default module params (alpha=beta=1, gamma=2)
    N, C = 8, 32
    logits = jax.random.normal(k1, (N, C), dtype=jnp.float32)
    targets = jax.random.randint(k2, (N,), 0, C, dtype=jnp.int32)

    out = concave_taylor_loss(logits, targets, alpha=1.0, beta=1.0, gamma=2)
    out = jax.block_until_ready(out)
    ref = _reference(logits, targets, alpha=1.0, beta=1.0, gamma=2)
    assert jnp.allclose(out, ref, atol=1e-5, rtol=1e-5), (out, ref)

    # Test 2: multi-tile grid with a ragged last tile and non-trivial alpha/beta
    N2, C2 = 20, 32
    logits2 = jax.random.normal(k3, (N2, C2), dtype=jnp.float32)
    targets2 = jax.random.randint(k4, (N2,), 0, C2, dtype=jnp.int32)

    out2 = concave_taylor_loss(logits2, targets2, alpha=0.7, beta=1.3, gamma=2,
                               tile_n=8)   # force grid=(3,), last tile has 4 rows
    out2 = jax.block_until_ready(out2)
    ref2 = _reference(logits2, targets2, alpha=0.7, beta=1.3, gamma=2)
    assert jnp.allclose(out2, ref2, atol=1e-5, rtol=1e-5), (out2, ref2)

    # Test 3: bf16 logits (halved HBM traffic path), multi-tile
    N3, C3 = 64, 48
    logits3 = jax.random.normal(k5, (N3, C3), dtype=jnp.float32).astype(jnp.bfloat16)
    targets3 = jax.random.randint(k6, (N3,), 0, C3, dtype=jnp.int32)

    out3 = concave_taylor_loss(logits3, targets3, alpha=0.5, beta=2.0, gamma=2,
                               tile_n=16)
    out3 = jax.block_until_ready(out3)
    ref3 = _reference(logits3, targets3, alpha=0.5, beta=2.0, gamma=2)
    assert jnp.allclose(out3, ref3, atol=1e-4, rtol=1e-4), (out3, ref3)

    print("KERNEL_OK")
</pallas_src>

<mosaic_0001>
module attributes {stable_mosaic.version = 11 : i64} {
  func.func @_concave_taylor_kernel(%arg0: i32, %arg1: memref<8x32xf32, #tpu.memory_space<vmem>>, %arg2: memref<8x1xi32, #tpu.memory_space<vmem>>, %arg3: memref<1x1xf32, #tpu.memory_space<smem>>, %arg4: memref<1xf32, #tpu.memory_space<smem>>) attributes {dimension_semantics = [#tpu.dimension_semantics<arbitrary>], iteration_bounds = array<i64: 1>, scalar_prefetch = 0 : i64, scratch_operands = 1 : i64, tpu.core_type = #tpu.core_type<tc>, window_params = [{transform_indices = @transform_0, window_bounds = array<i64: 8, 32>}, {transform_indices = @transform_1, window_bounds = array<i64: 8, 1>}, {transform_indices = @transform_2, window_bounds = array<i64: 1, 1>}]} {
    %c0_i32 = arith.constant 0 : i32
    %0 = arith.cmpi eq, %arg0, %c0_i32 : i32
    %1 = arith.extui %0 : i1 to i32
    %c0_i32_0 = arith.constant 0 : i32
    %2 = arith.cmpi ne, %1, %c0_i32_0 : i32
    scf.if %2 {
      %cst_20 = arith.constant 0.000000e+00 : f32
      %c0_21 = arith.constant 0 : index
      %56 = memref.load %arg4[%c0_21] : memref<1xf32, #tpu.memory_space<smem>>
      memref.store %cst_20, %arg4[%c0_21] : memref<1xf32, #tpu.memory_space<smem>>
    } else {
    }
    %c0 = arith.constant 0 : index
    %c0_1 = arith.constant 0 : index
    %3 = vector.load %arg1[%c0, %c0_1] : memref<8x32xf32, #tpu.memory_space<vmem>>, vector<8x32xf32>
    %c0_2 = arith.constant 0 : index
    %c0_3 = arith.constant 0 : index
    %4 = vector.load %arg2[%c0_2, %c0_3] : memref<8x1xi32, #tpu.memory_space<vmem>>, vector<8x1xi32>
    %cst = arith.constant dense<0xFF800000> : vector<8xf32>
    %5 = vector.multi_reduction <maximumf>, %3, %cst [1] : vector<8x32xf32> to vector<8xf32>
    %6 = vector.shape_cast %5 : vector<8xf32> to vector<8x1xf32>
    %7 = vector.broadcast %6 : vector<8x1xf32> to vector<8x32xf32>
    %8 = arith.subf %3, %7 : vector<8x32xf32>
    %9 = math.exp %8 : vector<8x32xf32>
    %cst_4 = arith.constant dense<0.000000e+00> : vector<8xf32>
    %10 = vector.multi_reduction <add>, %9, %cst_4 [1] : vector<8x32xf32> to vector<8xf32>
    %11 = vector.shape_cast %10 : vector<8xf32> to vector<8x1xf32>
    %12 = math.log %11 : vector<8x1xf32>
    %13 = arith.addf %6, %12 : vector<8x1xf32>
    %14 = tpu.iota {dimensions = array<i32: 1>} : vector<8x32xi32>
    %15 = vector.broadcast %4 : vector<8x1xi32> to vector<8x32xi32>
    %16 = arith.cmpi eq, %14, %15 : vector<8x32xi32>
    %cst_5 = arith.constant 0.000000e+00 : f32
    %17 = vector.broadcast %cst_5 : f32 to vector<8x32xf32>
    %18 = arith.select %16, %3, %17 : vector<8x32xi1>, vector<8x32xf32>
    %cst_6 = arith.constant dense<0.000000e+00> : vector<8xf32>
    %19 = vector.multi_reduction <add>, %18, %cst_6 [1] : vector<8x32xf32> to vector<8xf32>
    %20 = vector.shape_cast %19 : vector<8xf32> to vector<8x1xf32>
    %21 = arith.subf %13, %20 : vector<8x1xf32>
    %cst_7 = arith.constant 0.000000e+00 : f32
    %22 = vector.broadcast %cst_7 : f32 to vector<8x1xf32>
    %23 = arith.subf %22, %21 : vector<8x1xf32>
    %24 = math.exp %23 : vector<8x1xf32>
    %cst_8 = arith.constant 1.000000e+00 : f32
    %25 = vector.broadcast %cst_8 : f32 to vector<8x1xf32>
    %26 = arith.mulf %25, %21 : vector<8x1xf32>
    %cst_9 = arith.constant 1.000000e+00 : f32
    %27 = vector.broadcast %cst_9 : f32 to vector<8x1xf32>
    %28 = arith.mulf %27, %26 : vector<8x1xf32>
    %cst_10 = arith.constant 0.000000e+00 : f32
    %29 = vector.broadcast %cst_10 : f32 to vector<8x1xf32>
    %30 = arith.mulf %29, %24 : vector<8x1xf32>
    %31 = arith.subf %28, %30 : vector<8x1xf32>
    %32 = arith.mulf %24, %24 : vector<8x1xf32>
    %cst_11 = arith.constant 1.000000e+00 : f32
    %33 = vector.broadcast %cst_11 : f32 to vector<8x1xf32>
    %34 = arith.mulf %33, %31 : vector<8x1xf32>
    %cst_12 = arith.constant 0.000000e+00 : f32
    %35 = vector.broadcast %cst_12 : f32 to vector<8x1xf32>
    %36 = arith.mulf %35, %32 : vector<8x1xf32>
    %37 = arith.subf %34, %36 : vector<8x1xf32>
    %38 = tpu.iota {dimensions = array<i32: 0>} : vector<8x1xi32>
    %c8_i32 = arith.constant 8 : i32
    %39 = arith.muli %arg0, %c8_i32 : i32
    %40 = vector.broadcast %39 : i32 to vector<8x1xi32>
    %41 = arith.addi %38, %40 : vector<8x1xi32>
    %c8_i32_13 = arith.constant 8 : i32
    %42 = vector.broadcast %c8_i32_13 : i32 to vector<8x1xi32>
    %43 = arith.cmpi slt, %41, %42 : vector<8x1xi32>
    %cst_14 = arith.constant 0.000000e+00 : f32
    %44 = vector.broadcast %cst_14 : f32 to vector<8x1xf32>
    %45 = arith.select %43, %37, %44 : vector<8x1xi1>, vector<8x1xf32>
    %c0_15 = arith.constant 0 : index
    %46 = memref.load %arg4[%c0_15] : memref<1xf32, #tpu.memory_space<smem>>
    %47 = vector.shape_cast %45 : vector<8x1xf32> to vector<1x8x1xf32>
    %cst_16 = arith.constant dense<0.000000e+00> : vector<1xf32>
    %48 = vector.multi_reduction <add>, %47, %cst_16 [1, 2] : vector<1x8x1xf32> to vector<1xf32>
    %49 = vector.shape_cast %48 : vector<1xf32> to vector<1x1x1xf32>
    %50 = vector.extract %49[0, 0, 0] : f32 from vector<1x1x1xf32>
    %51 = arith.addf %46, %50 : f32
    %c0_17 = arith.constant 0 : index
    %52 = memref.load %arg4[%c0_17] : memref<1xf32, #tpu.memory_space<smem>>
    memref.store %51, %arg4[%c0_17] : memref<1xf32, #tpu.memory_space<smem>>
    %c0_i32_18 = arith.constant 0 : i32
    %53 = arith.cmpi eq, %arg0, %c0_i32_18 : i32
    %54 = arith.extui %53 : i1 to i32
    %c0_i32_19 = arith.constant 0 : i32
    %55 = arith.cmpi ne, %54, %c0_i32_19 : i32
    scf.if %55 {
      %c0_20 = arith.constant 0 : index
      %56 = memref.load %arg4[%c0_20] : memref<1xf32, #tpu.memory_space<smem>>
      %cst_21 = arith.constant 1.250000e-01 : f32
      %57 = arith.mulf %56, %cst_21 : f32
      %c0_22 = arith.constant 0 : index
      %c0_23 = arith.constant 0 : index
      %58 = memref.load %arg3[%c0_22, %c0_23] : memref<1x1xf32, #tpu.memory_space<smem>>
      memref.store %57, %arg3[%c0_22, %c0_23] : memref<1x1xf32, #tpu.memory_space<smem>>
    } else {
    }
    return
  }
  func.func @transform_0(%arg0: i32) -> (i32, i32) {
    %c0_i32 = arith.constant 0 : i32
    %c0_i32_0 = arith.constant 0 : i32
    return %arg0, %c0_i32 : i32, i32
  }
  func.func @transform_1(%arg0: i32) -> (i32, i32) {
    %c0_i32 = arith.constant 0 : i32
    %c0_i32_0 = arith.constant 0 : i32
    return %arg0, %c0_i32 : i32, i32
  }
  func.func @transform_2(%arg0: i32) -> (i32, i32) {
    %c0_i32 = arith.constant 0 : i32
    %c0_i32_0 = arith.constant 0 : i32
    %c0_i32_1 = arith.constant 0 : i32
    return %c0_i32, %c0_i32_0 : i32, i32
  }
}

</mosaic_0001>

<llo_original>
// kernel: tpu_custom_call.1
$region0: #{tpu_custom_call.1}
  #allocation0 [shape = 'u32[]', space=smem, size = 0x4, offset = 0x4, fixed_abs, tag = 'smem constant byte address 0x4 - core index']
  #allocation1 [shape = 'u32[144,128]{1,0:T(1,128)}', space=vmem, size = 0x12000, scoped, tag = 'internal scratch']
  #allocation2 [shape = 'f32[1]{0:T(128)}', space=smem, size = 0x200, scoped, tag = 'scratch operand']
  %s0 = inlined_call_operand.vmem [shape: f32[8,32], index: 0, kind: input, shape index: {}]
  %s1 = inlined_call_operand.vmem [shape: s32[8,1], index: 1, kind: input, shape index: {}]
  %s2 = inlined_call_operand.hbm [shape: f32[1,1], index: 2, kind: output, shape index: {}]
  %s3 = sld [smem:[#allocation0]]
  $region26: #{tpu_custom_call.1} parent=0
    _
  %s5 = ssub.s32 1, %s3
  %s6 = scalar_select 0, %s5, %s3
  $region1: #{tpu_custom_call.1} parent=0
    #allocation3 [shape = 'u8[512]{0}', space=smem, size = 0x200, scoped, tag = 'output window, operand 0, single buffered']
    #allocation4 [shape = 's32[1]{0}', space=sflag, size = 0x4, scoped, tag = 'scoped memory for tpu_custom_call.1']
    %7 = vsyncpa [#allocation4], 0
    // Predicated region
    $region2: #{tpu_custom_call.1} parent=1 // pred_check
      _
    $region3: #{tpu_custom_call.1} parent=1 // pred_check_branch
      %9 = sbr.rel (0) target = $region5
    $region4: #{tpu_custom_call.1} parent=1 // pred_region
      _
    $region5: #{tpu_custom_call.1} parent=1 // pred_fallthru
      _
    // Predicated region
    $region6: #{tpu_custom_call.1} parent=1 // pred_check
      _
    $region7: #{tpu_custom_call.1} parent=1 // pred_check_branch
      %11 = sbr.rel (0) target = $region9
    $region8: #{tpu_custom_call.1} parent=1 // pred_region
      _
    $region9: #{tpu_custom_call.1} parent=1 // pred_fallthru
      _
    %p12 = scmp.eq.s32.totalorder 0, 0
    // Predicated region
    $region10: #{tpu_custom_call.1} parent=1 // pred_check
      %p13 = pneg %p12
    $region11: #{tpu_custom_call.1} parent=1 // pred_check_branch
      %15 = sbr.rel (%p13) target = $region13
    $region12: #{tpu_custom_call.1} parent=1 // pred_region
      %s16 = scalar_lea.smem [#allocation2], 0
      %17 = sst [smem:[%s16]] 0.0
    $region13: #{tpu_custom_call.1} parent=1 // pred_fallthru
      _
    %v18 = vld [vmem:[%s0] sm:$0xff]
    %v19 = vld [vmem:[%s1] sm:$0xff]
    %vm20 = vcmask 261120
    %v21 = vsel %vm20, %v18, -inf
    %22 = vmax.xlane.f32.xlu0 %v21
    %v23 = vpop.xlane.xlu0 %22
    %v24 = vsub.f32 %v18, %v23
    %v25 = vmul.f32 %v24, 1.442695
    %v26 = vpow.pop %v25
    %v27 = vsel %vm20, %v26, 0.0
    %28 = vadd.xlane.f32.xlu0 %v27
    %v29 = vpop.xlane.xlu0 %28
    %v30 = vlog2.pop %v29
    %v31 = vmul.f32 %v30, 0.6931472
    %v32 = vadd.f32 %v23, %v31
    %v33 = vlaneseq
    %v34 = vand.u32 %v33, 127
    %35 = vset.pattern.permute.xlu0 0
    %36 = vperm.xlu0 %35, %v19
    %v37 = vpop.permute.xlu0 %36
    %vm38 = vcmp.eq.s32.totalorder %v34, %v37
    %v39 = vsel %vm38, %v18, 0.0
    %v40 = vsel %vm20, %v39, 0.0
    %41 = vadd.xlane.f32.xlu0 %v40
    %v42 = vpop.xlane.xlu0 %41
    %v43 = vsub.f32 %v32, %v42
    %v44 = vsub.f32 0.0, %v43
    %v45 = vmul.f32 %v44, 1.442695
    %v46 = vpow.pop %v45
    %v47 = vmul.f32 %v46, 0.0
    %v48 = vsub.f32 %v43, %v47
    %v49 = vmul.f32 %v46, %v46
    %v50 = vmul.f32 %v49, 0.0
    %v51 = vsub.f32 %v48, %v50
    %v52 = vlaneseq
    %v53 = vshrl.u32 %v52, 7
    %s54 = smul.u32 0, 8
    %v55 = vstv %s54
    %v56 = vadd.s32 %v53, %v55
    %vm57 = vcmp.lt.s32.totalorder %v56, 8
    %v58 = vsel %vm57, %v51, 0.0
    %s59 = sld [smem:[#allocation2]]
    %vm60 = vcmask 7168
    %v61 = vsel %vm60, %v58, 0.0
    %62 = vadd.xlane.f32.xlu0 %v61
    %v63 = vpop.xlane.xlu0 %62
    %v64 = vrot.slane %v63, 4
    %v65 = vadd.f32 %v63, %v64
    %v66 = vrot.slane %v65, 2
    %v67 = vadd.f32 %v65, %v66
    %v68 = vrot.slane %v67, 1
    %v69 = vadd.f32 %v67, %v68
    %s70 = vtos %v69
    %s71 = sadd.f32 %s59, %s70
    %s72 = scalar_lea.smem [#allocation2], 0
    %73 = sst [smem:[%s72]] %s71
    // Predicated region
    $region14: #{tpu_custom_call.1} parent=1 // pred_check
      %p74 = pneg %p12
    $region15: #{tpu_custom_call.1} parent=1 // pred_check_branch
      %76 = sbr.rel (%p74) target = $region17
    $region16: #{tpu_custom_call.1} parent=1 // pred_region
      %s77 = sld [smem:[#allocation2]]
      %s78 = smul.f32 %s77, 0.125
      %s79 = scalar_lea.smem [#allocation3], 0
      %80 = sst [smem:[%s79]] %s78
    $region17: #{tpu_custom_call.1} parent=1 // pred_fallthru
      _
    // Predicated region
    $region18: #{tpu_custom_call.1} parent=1 // pred_check
      _
    $region19: #{tpu_custom_call.1} parent=1 // pred_check_branch
      %82 = sbr.rel (0) target = $region21
    $region20: #{tpu_custom_call.1} parent=1 // pred_region
      %s84 = ssub.s32 16, 16
      %85 = vsyncadd [#allocation4], %s84
      %88 = dma.smem_to_hbm [#allocation3], 16, %s2, [#allocation4]
    $region21: #{tpu_custom_call.1} parent=1 // pred_fallthru
      _
    // Predicated region
    $region22: #{tpu_custom_call.1} parent=1 // pred_check
      _
    $region23: #{tpu_custom_call.1} parent=1 // pred_check_branch
      %90 = sbr.rel (0) target = $region25
    $region24: #{tpu_custom_call.1} parent=1 // pred_region
      %91 = dma.done [#allocation4], 16
    $region25: #{tpu_custom_call.1} parent=1 // pred_fallthru
      _
    %92 = sfence
    %93 = vsyncpa [#allocation4], 1

</llo_original>
